<compile_context>
chip_gen: v7x
topology: tpu7x:2x2x1
jax: 0.10.0
libtpu: 0.0.40
codegen_flags: <defaults>
</compile_context>

<pallas_src>
import functools

import jax
import jax.numpy as jnp
from jax.experimental import pallas as pl
from jax.experimental.pallas import tpu as pltpu


def _round_up(x, m):
    return ((x + m - 1) // m) * m


def _highway_kernel(x_ref, w_ref, b_ref, o_ref, *, num_layers, width):
    """Process one [tile_m, P] packed row tile through all highway layers.

    x_ref : [tile_m, P]    packed activation tile (P = pack * D, lane-dense)
    w_ref : [L, P, 2P]     block-diagonal (linear | gate) weights, VMEM-resident
    b_ref : [L, 1, 2P]     packed biases (f32), VMEM-resident
    o_ref : [tile_m, P]    output tile
    """
    P = width
    mm_dtype = w_ref.dtype
    out = x_ref[...].astype(jnp.float32)
    for l in range(num_layers):  # static unroll; num_layers small & fixed
        # One fused matmul per layer; f32 accumulation on the MXU.
        y = jnp.dot(out.astype(mm_dtype), w_ref[l],
                    preferred_element_type=jnp.float32) + b_ref[l]
        h = jnp.maximum(y[:, :P], 0.0)        # relu(linear), 128-lane aligned
        t_ = jax.nn.sigmoid(y[:, P:])         # gate (EUP)
        out = out + t_ * (h - out)            # == h*t + out*(1-t), one less mul
    o_ref[...] = out.astype(o_ref.dtype)


def highwaynet(x, w_lin, b_lin, w_gate, b_gate, *, tile_m=2048,
               matmul_dtype=jnp.bfloat16):
    """Highwaynet forward.

    x             : [B, S, D]
    w_lin, w_gate : [L, D, D] in torch nn.Linear layout (out_dim, in_dim)
    b_lin, b_gate : [L, D]
    Returns [B, S, D] in x.dtype.
    """
    B, S, D = x.shape
    L = w_lin.shape[0]
    M = B * S

    # Lane packing: pack p consecutive rows into one 128-wide kernel row when
    # D divides 128 (free row-major reshape of [M, D] -> [M/p, p*D] in HBM).
    if D < 128 and (128 % D == 0) and (M % (128 // D) == 0):
        p = 128 // D
    else:
        p = 1
    P = p * D

    # Block-diagonal fused weights: torch (out,in) -> (in,out), then p copies
    # on the diagonal so packed-row j only sees its own input/output lanes.
    wl_t = jnp.swapaxes(w_lin, 1, 2)          # [L, D, D]  (in, out)
    wg_t = jnp.swapaxes(w_gate, 1, 2)
    if p == 1:
        w_fused = jnp.concatenate([wl_t, wg_t], axis=-1)          # [L, D, 2D]
    else:
        eye = jnp.eye(p, dtype=wl_t.dtype)                        # [p, p]
        blk_lin = (eye[None, :, None, :, None]
                   * wl_t[:, None, :, None, :]).reshape(L, P, P)
        blk_gate = (eye[None, :, None, :, None]
                    * wg_t[:, None, :, None, :]).reshape(L, P, P)
        w_fused = jnp.concatenate([blk_lin, blk_gate], axis=-1)   # [L, P, 2P]
    w_fused = w_fused.astype(matmul_dtype)
    b_fused = jnp.concatenate(
        [jnp.tile(b_lin, (1, p)), jnp.tile(b_gate, (1, p))], axis=-1)
    b_fused = b_fused[:, None, :].astype(jnp.float32)             # [L, 1, 2P]

    # Row tiling over packed rows: big tiles amortize per-step overhead; no
    # wrapper-side padding -- ragged final tile is handled by Pallas (masked
    # OOB writes).  Keep >=2 grid steps for large inputs (v7x megacore).
    Mp = M // p
    tm = max(8, min(_round_up(tile_m, 8), _round_up(Mp, 8)))
    if Mp >= 16:
        tm = min(tm, _round_up(pl.cdiv(Mp, 2), 8))
    grid = (pl.cdiv(Mp, tm),)

    # Scheduler hint for XLA (logical work, not the padded block-diag flops).
    itemsize_x = jnp.dtype(x.dtype).itemsize
    itemsize_w = jnp.dtype(w_fused.dtype).itemsize
    flops = 2 * M * D * (2 * D) * L
    transcendentals = M * D * L                     # sigmoid exp per gate elem
    bytes_accessed = (2 * M * D * itemsize_x
                      + w_fused.size * itemsize_w + b_fused.size * 4)

    # VMEM budget: in/out tiles (double-buffered) + single-buffered weights
    # + f32 temporaries.  Capped at 48 MiB so there is headroom on v7x (64
    # MiB/TC) for compiler scratch.
    needed = (2 * 2 * tm * P * itemsize_x
              + w_fused.size * itemsize_w + b_fused.size * 4
              + 8 * tm * 2 * P * 4)
    vmem_limit = int(min(48 * 2**20, max(32 * 2**20, 2 * needed)))

    xp = x.reshape(Mp, P)                            # free reshape, no copy
    kernel = functools.partial(_highway_kernel, num_layers=L, width=P)
    out2 = pl.pallas_call(
        kernel,
        out_shape=jax.ShapeDtypeStruct((Mp, P), x.dtype),
        grid_spec=pltpu.PrefetchScalarGridSpec(
            num_scalar_prefetch=0,
            grid=grid,
            in_specs=[
                pl.BlockSpec((tm, P), lambda i: (i, 0)),      # activations
                # Grid-invariant weights/biases: whole arrays resident in
                # VMEM, copied once, not double-buffered per grid step.
                pl.BlockSpec(memory_space=pltpu.MemorySpace.VMEM),
                pl.BlockSpec(memory_space=pltpu.MemorySpace.VMEM),
            ],
            out_specs=pl.BlockSpec((tm, P), lambda i: (i, 0)),
        ),
        compiler_params=pltpu.CompilerParams(
            dimension_semantics=("parallel",),
            vmem_limit_bytes=vmem_limit),
        cost_estimate=pl.CostEstimate(
            flops=flops, transcendentals=transcendentals,
            bytes_accessed=bytes_accessed),
    )(xp, w_fused, b_fused)

    return out2.reshape(B, S, D)


# ---------------- parameter init + pure-JAX reference ----------------

def _xavier_uniform(key, shape):
    # shape = (out_dim, in_dim) like torch.nn.Linear.weight; gain('linear')=1.
    fan_out, fan_in = shape
    bound = (6.0 / (fan_in + fan_out)) ** 0.5
    return jax.random.uniform(key, shape, jnp.float32, -bound, bound)


def init_highway_params(key, num_units, num_layers=4):
    """Deterministic params in torch layout: w_*: [L, D, D] (out,in), b_*: [L, D]."""
    D = num_units
    bias_bound = 1.0 / (D ** 0.5)
    w_lin, b_lin, w_gate, b_gate = [], [], [], []
    for _ in range(num_layers):
        k1, k2, k3, k4, key = jax.random.split(key, 5)
        w_lin.append(_xavier_uniform(k1, (D, D)))
        w_gate.append(_xavier_uniform(k2, (D, D)))
        b_lin.append(jax.random.uniform(k3, (D,), jnp.float32,
                                        -bias_bound, bias_bound))
        b_gate.append(jax.random.uniform(k4, (D,), jnp.float32,
                                         -bias_bound, bias_bound))
    return (jnp.stack(w_lin), jnp.stack(b_lin),
            jnp.stack(w_gate), jnp.stack(b_gate))


def highway_reference(x, w_lin, b_lin, w_gate, b_gate):
    """Pure-JAX reference mirroring the PyTorch forward (x @ W.T + b)."""
    out = x
    for l in range(w_lin.shape[0]):
        h = jax.nn.relu(out @ w_lin[l].T + b_lin[l])
        t_ = jax.nn.sigmoid(out @ w_gate[l].T + b_gate[l])
        out = h * t_ + out * (1.0 - t_)
    return out


if __name__ == "__main__":
    key = jax.random.PRNGKey(0)
    kx, kp = jax.random.split(key)

    batch, seq, num_units, num_layers = 2, 16, 64, 4
    x = jax.random.normal(kx, (batch, seq, num_units), jnp.float32)
    params = init_highway_params(kp, num_units, num_layers)
    ref = highway_reference(x, *params)

    # Exact path: f32 matmul operands -> matches the reference tightly.
    out_f32 = jax.block_until_ready(
        highwaynet(x, *params, matmul_dtype=jnp.float32))
    assert out_f32.shape == (batch, seq, num_units)
    err_f32 = float(jnp.max(jnp.abs(out_f32 - ref)))
    assert jnp.allclose(out_f32, ref, atol=1e-5, rtol=1e-5), err_f32

    # Fast path: bf16 matmul operands (MXU-native), f32 accumulation and f32
    # elementwise -> looser tolerance from bf16 operand rounding only.
    out_bf16 = jax.block_until_ready(
        highwaynet(x, *params, matmul_dtype=jnp.bfloat16))
    err_bf16 = float(jnp.max(jnp.abs(out_bf16 - ref)))
    assert err_bf16 < 0.25, err_bf16

    print("KERNEL_OK")
</pallas_src>

<mosaic_0001>
module attributes {stable_mosaic.version = 11 : i64} {
  func.func @_highway_kernel(%arg0: i32, %arg1: memref<8x128xf32, #tpu.memory_space<vmem>>, %arg2: memref<4x128x256xf32, #tpu.memory_space<vmem>>, %arg3: memref<4x1x256xf32, #tpu.memory_space<vmem>>, %arg4: memref<8x128xf32, #tpu.memory_space<vmem>>) attributes {dimension_semantics = [#tpu.dimension_semantics<parallel>], iteration_bounds = array<i64: 2>, scalar_prefetch = 0 : i64, scratch_operands = 0 : i64, tpu.core_type = #tpu.core_type<tc>, window_params = [{transform_indices = @transform_0, window_bounds = array<i64: 8, 128>}, {pipeline_mode = #tpu.pipeline_mode<synchronous>, transform_indices = @transform_1, window_bounds = array<i64: 4, 128, 256>}, {pipeline_mode = #tpu.pipeline_mode<synchronous>, transform_indices = @transform_2, window_bounds = array<i64: 4, 1, 256>}, {transform_indices = @transform_3, window_bounds = array<i64: 8, 128>}]} {
    %c0 = arith.constant 0 : index
    %c0_0 = arith.constant 0 : index
    %0 = vector.load %arg1[%c0, %c0_0] : memref<8x128xf32, #tpu.memory_space<vmem>>, vector<8x128xf32>
    %c0_1 = arith.constant 0 : index
    %c0_2 = arith.constant 0 : index
    %c0_3 = arith.constant 0 : index
    %1 = vector.load %arg2[%c0_1, %c0_2, %c0_3] : memref<4x128x256xf32, #tpu.memory_space<vmem>>, vector<1x128x256xf32>
    %2 = vector.shape_cast %1 : vector<1x128x256xf32> to vector<128x256xf32>
    %cst = arith.constant dense<0.000000e+00> : vector<8x256xf32>
    %3 = tpu.matmul %0, %2, %cst {dimension_numbers = #tpu.dot_dimension_numbers<[1], [0], [0], [1], [0, 0, 1, 1], [], []>} : vector<8x128xf32>, vector<128x256xf32>, vector<8x256xf32> -> vector<8x256xf32>
    %c0_4 = arith.constant 0 : index
    %c0_5 = arith.constant 0 : index
    %c0_6 = arith.constant 0 : index
    %4 = vector.load %arg3[%c0_4, %c0_5, %c0_6] : memref<4x1x256xf32, #tpu.memory_space<vmem>>, vector<1x1x256xf32>
    %5 = vector.shape_cast %4 : vector<1x1x256xf32> to vector<1x256xf32>
    %6 = vector.broadcast %5 : vector<1x256xf32> to vector<8x256xf32>
    %7 = arith.addf %3, %6 : vector<8x256xf32>
    %8 = vector.extract_strided_slice %7 {offsets = [0, 0], sizes = [8, 128], strides = [1, 1]} : vector<8x256xf32> to vector<8x128xf32>
    %cst_7 = arith.constant 0.000000e+00 : f32
    %9 = vector.broadcast %cst_7 : f32 to vector<8x128xf32>
    %10 = arith.maximumf %8, %9 : vector<8x128xf32>
    %11 = vector.extract_strided_slice %7 {offsets = [0, 128], sizes = [8, 128], strides = [1, 1]} : vector<8x256xf32> to vector<8x128xf32>
    %12 = arith.negf %11 : vector<8x128xf32>
    %13 = math.exp %12 : vector<8x128xf32>
    %cst_8 = arith.constant 1.000000e+00 : f32
    %14 = vector.broadcast %cst_8 : f32 to vector<8x128xf32>
    %15 = arith.addf %14, %13 : vector<8x128xf32>
    %16 = arith.divf %14, %15 : vector<8x128xf32>
    %17 = arith.subf %10, %0 : vector<8x128xf32>
    %18 = arith.mulf %16, %17 : vector<8x128xf32>
    %19 = arith.addf %0, %18 : vector<8x128xf32>
    %c1 = arith.constant 1 : index
    %c0_9 = arith.constant 0 : index
    %c0_10 = arith.constant 0 : index
    %20 = vector.load %arg2[%c1, %c0_9, %c0_10] : memref<4x128x256xf32, #tpu.memory_space<vmem>>, vector<1x128x256xf32>
    %21 = vector.shape_cast %20 : vector<1x128x256xf32> to vector<128x256xf32>
    %cst_11 = arith.constant dense<0.000000e+00> : vector<8x256xf32>
    %22 = tpu.matmul %19, %21, %cst_11 {dimension_numbers = #tpu.dot_dimension_numbers<[1], [0], [0], [1], [0, 0, 1, 1], [], []>} : vector<8x128xf32>, vector<128x256xf32>, vector<8x256xf32> -> vector<8x256xf32>
    %c1_12 = arith.constant 1 : index
    %c0_13 = arith.constant 0 : index
    %c0_14 = arith.constant 0 : index
    %23 = vector.load %arg3[%c1_12, %c0_13, %c0_14] : memref<4x1x256xf32, #tpu.memory_space<vmem>>, vector<1x1x256xf32>
    %24 = vector.shape_cast %23 : vector<1x1x256xf32> to vector<1x256xf32>
    %25 = vector.broadcast %24 : vector<1x256xf32> to vector<8x256xf32>
    %26 = arith.addf %22, %25 : vector<8x256xf32>
    %27 = vector.extract_strided_slice %26 {offsets = [0, 0], sizes = [8, 128], strides = [1, 1]} : vector<8x256xf32> to vector<8x128xf32>
    %cst_15 = arith.constant 0.000000e+00 : f32
    %28 = vector.broadcast %cst_15 : f32 to vector<8x128xf32>
    %29 = arith.maximumf %27, %28 : vector<8x128xf32>
    %30 = vector.extract_strided_slice %26 {offsets = [0, 128], sizes = [8, 128], strides = [1, 1]} : vector<8x256xf32> to vector<8x128xf32>
    %31 = arith.negf %30 : vector<8x128xf32>
    %32 = math.exp %31 : vector<8x128xf32>
    %cst_16 = arith.constant 1.000000e+00 : f32
    %33 = vector.broadcast %cst_16 : f32 to vector<8x128xf32>
    %34 = arith.addf %33, %32 : vector<8x128xf32>
    %35 = arith.divf %33, %34 : vector<8x128xf32>
    %36 = arith.subf %29, %19 : vector<8x128xf32>
    %37 = arith.mulf %35, %36 : vector<8x128xf32>
    %38 = arith.addf %19, %37 : vector<8x128xf32>
    %c2 = arith.constant 2 : index
    %c0_17 = arith.constant 0 : index
    %c0_18 = arith.constant 0 : index
    %39 = vector.load %arg2[%c2, %c0_17, %c0_18] : memref<4x128x256xf32, #tpu.memory_space<vmem>>, vector<1x128x256xf32>
    %40 = vector.shape_cast %39 : vector<1x128x256xf32> to vector<128x256xf32>
    %cst_19 = arith.constant dense<0.000000e+00> : vector<8x256xf32>
    %41 = tpu.matmul %38, %40, %cst_19 {dimension_numbers = #tpu.dot_dimension_numbers<[1], [0], [0], [1], [0, 0, 1, 1], [], []>} : vector<8x128xf32>, vector<128x256xf32>, vector<8x256xf32> -> vector<8x256xf32>
    %c2_20 = arith.constant 2 : index
    %c0_21 = arith.constant 0 : index
    %c0_22 = arith.constant 0 : index
    %42 = vector.load %arg3[%c2_20, %c0_21, %c0_22] : memref<4x1x256xf32, #tpu.memory_space<vmem>>, vector<1x1x256xf32>
    %43 = vector.shape_cast %42 : vector<1x1x256xf32> to vector<1x256xf32>
    %44 = vector.broadcast %43 : vector<1x256xf32> to vector<8x256xf32>
    %45 = arith.addf %41, %44 : vector<8x256xf32>
    %46 = vector.extract_strided_slice %45 {offsets = [0, 0], sizes = [8, 128], strides = [1, 1]} : vector<8x256xf32> to vector<8x128xf32>
    %cst_23 = arith.constant 0.000000e+00 : f32
    %47 = vector.broadcast %cst_23 : f32 to vector<8x128xf32>
    %48 = arith.maximumf %46, %47 : vector<8x128xf32>
    %49 = vector.extract_strided_slice %45 {offsets = [0, 128], sizes = [8, 128], strides = [1, 1]} : vector<8x256xf32> to vector<8x128xf32>
    %50 = arith.negf %49 : vector<8x128xf32>
    %51 = math.exp %50 : vector<8x128xf32>
    %cst_24 = arith.constant 1.000000e+00 : f32
    %52 = vector.broadcast %cst_24 : f32 to vector<8x128xf32>
    %53 = arith.addf %52, %51 : vector<8x128xf32>
    %54 = arith.divf %52, %53 : vector<8x128xf32>
    %55 = arith.subf %48, %38 : vector<8x128xf32>
    %56 = arith.mulf %54, %55 : vector<8x128xf32>
    %57 = arith.addf %38, %56 : vector<8x128xf32>
    %c3 = arith.constant 3 : index
    %c0_25 = arith.constant 0 : index
    %c0_26 = arith.constant 0 : index
    %58 = vector.load %arg2[%c3, %c0_25, %c0_26] : memref<4x128x256xf32, #tpu.memory_space<vmem>>, vector<1x128x256xf32>
    %59 = vector.shape_cast %58 : vector<1x128x256xf32> to vector<128x256xf32>
    %cst_27 = arith.constant dense<0.000000e+00> : vector<8x256xf32>
    %60 = tpu.matmul %57, %59, %cst_27 {dimension_numbers = #tpu.dot_dimension_numbers<[1], [0], [0], [1], [0, 0, 1, 1], [], []>} : vector<8x128xf32>, vector<128x256xf32>, vector<8x256xf32> -> vector<8x256xf32>
    %c3_28 = arith.constant 3 : index
    %c0_29 = arith.constant 0 : index
    %c0_30 = arith.constant 0 : index
    %61 = vector.load %arg3[%c3_28, %c0_29, %c0_30] : memref<4x1x256xf32, #tpu.memory_space<vmem>>, vector<1x1x256xf32>
    %62 = vector.shape_cast %61 : vector<1x1x256xf32> to vector<1x256xf32>
    %63 = vector.broadcast %62 : vector<1x256xf32> to vector<8x256xf32>
    %64 = arith.addf %60, %63 : vector<8x256xf32>
    %65 = vector.extract_strided_slice %64 {offsets = [0, 0], sizes = [8, 128], strides = [1, 1]} : vector<8x256xf32> to vector<8x128xf32>
    %cst_31 = arith.constant 0.000000e+00 : f32
    %66 = vector.broadcast %cst_31 : f32 to vector<8x128xf32>
    %67 = arith.maximumf %65, %66 : vector<8x128xf32>
    %68 = vector.extract_strided_slice %64 {offsets = [0, 128], sizes = [8, 128], strides = [1, 1]} : vector<8x256xf32> to vector<8x128xf32>
    %69 = arith.negf %68 : vector<8x128xf32>
    %70 = math.exp %69 : vector<8x128xf32>
    %cst_32 = arith.constant 1.000000e+00 : f32
    %71 = vector.broadcast %cst_32 : f32 to vector<8x128xf32>
    %72 = arith.addf %71, %70 : vector<8x128xf32>
    %73 = arith.divf %71, %72 : vector<8x128xf32>
    %74 = arith.subf %67, %57 : vector<8x128xf32>
    %75 = arith.mulf %73, %74 : vector<8x128xf32>
    %76 = arith.addf %57, %75 : vector<8x128xf32>
    %c0_33 = arith.constant 0 : index
    %c0_34 = arith.constant 0 : index
    %77 = vector.load %arg4[%c0_33, %c0_34] : memref<8x128xf32, #tpu.memory_space<vmem>>, vector<8x128xf32>
    tpu.vector_store %arg4[%c0_33, %c0_34], %76 {strides = array<i32>} : memref<8x128xf32, #tpu.memory_space<vmem>>, vector<8x128xf32>,
    return
  }
  func.func @transform_0(%arg0: i32) -> (i32, i32) {
    %c0_i32 = arith.constant 0 : i32
    %c0_i32_0 = arith.constant 0 : i32
    return %arg0, %c0_i32 : i32, i32
  }
  func.func @transform_1(%arg0: i32) -> (i32, i32, i32) {
    %c0_i32 = arith.constant 0 : i32
    %c0_i32_0 = arith.constant 0 : i32
    %c0_i32_1 = arith.constant 0 : i32
    %c0_i32_2 = arith.constant 0 : i32
    return %c0_i32, %c0_i32_0, %c0_i32_1 : i32, i32, i32
  }
  func.func @transform_2(%arg0: i32) -> (i32, i32, i32) {
    %c0_i32 = arith.constant 0 : i32
    %c0_i32_0 = arith.constant 0 : i32
    %c0_i32_1 = arith.constant 0 : i32
    %c0_i32_2 = arith.constant 0 : i32
    return %c0_i32, %c0_i32_0, %c0_i32_1 : i32, i32, i32
  }
  func.func @transform_3(%arg0: i32) -> (i32, i32) {
    %c0_i32 = arith.constant 0 : i32
    %c0_i32_0 = arith.constant 0 : i32
    return %arg0, %c0_i32 : i32, i32
  }
}

</mosaic_0001>

<llo_original>
// kernel: tpu_custom_call.1
$region0: #{tpu_custom_call.1}
  #allocation0 [shape = 'u32[]', space=smem, size = 0x4, offset = 0x4, fixed_abs, tag = 'smem constant byte address 0x4 - core index']
  #allocation1 [shape = 'u32[144,128]{1,0:T(1,128)}', space=vmem, size = 0x12000, scoped, tag = 'internal scratch']
  %s0 = inlined_call_operand.hbm [shape: f32[16,128], index: 0, kind: input, shape index: {}]
  %s1 = inlined_call_operand.hbm [shape: f32[4,128,256], index: 1, kind: input, shape index: {}]
  %s2 = inlined_call_operand.hbm [shape: f32[4,1,256], index: 2, kind: input, shape index: {}]
  %s3 = inlined_call_operand.hbm [shape: f32[16,128], index: 3, kind: output, shape index: {}]
  %s4 = sld [smem:[#allocation0]]
  $region57: #{tpu_custom_call.1} parent=0
    _
  %s6 = ssub.s32 1, %s4
  %s7 = scalar_select 0, %s6, %s4
  $region1: #{tpu_custom_call.1} parent=0
    #allocation2 [shape = 'u8[8192]{0}', space=vmem, size = 0x2000, scoped, tag = 'input window, operand 0']
    #allocation3 [shape = 's32[2]{0}', space=sflag, size = 0x8, scoped, tag = 'scoped memory for tpu_custom_call.1']
    #allocation4 [shape = 's32[2]{0}', space=sflag, size = 0x8, scoped, tag = 'scoped memory for tpu_custom_call.1']
    #allocation5 [shape = 'u8[524288]{0}', space=vmem, size = 0x80000, scoped, tag = 'input window, operand 1, single buffered']
    #allocation6 [shape = 's32[1]{0}', space=sflag, size = 0x4, scoped, tag = 'scoped memory for tpu_custom_call.1']
    #allocation7 [shape = 'u8[4096]{0}', space=vmem, size = 0x1000, scoped, tag = 'input window, operand 2, single buffered']
    #allocation8 [shape = 'u8[8192]{0}', space=vmem, size = 0x2000, scoped, tag = 'output window, operand 0']
    %8 = vsyncpa [#allocation3], 0
    %s9 = scalar_lea.sflag [#allocation3], 1
    %10 = vsyncpa %s9, 0
    %11 = vsyncpa [#allocation6], 0
    %12 = vsyncpa [#allocation4], 0
    %s13 = scalar_lea.sflag [#allocation4], 1
    %14 = vsyncpa %s13, 0
    loop: start=0, step=1, limit=4
    $region2: #{tpu_custom_call.1} parent=1 // loop_pre_header
      _
    $region3: #{tpu_custom_call.1} parent=1 // loop_header
      %s16 = sphi 0, %s20
      %p17 = scmp.ge.s32.totalorder %s16, 4
      %s26 = sphi 0, %s28
      %s29 = sphi 0, %s26
      %s30 = sphi 0, %s29
      %s46 = sphi 0, %s30
      %s50 = sphi 0, %s50
      %s52 = sphi 0, %s50
      %s53 = sphi 0, %s52
      %s67 = sphi 0, %s53
      %s71 = sphi 0, %s71
      %s73 = sphi 0, %s71
      %s74 = sphi 0, %s73
      %s88 = sphi 0, %s74
      %s94 = sphi 0, %s96
      %s97 = sphi 0, %s94
      %s98 = sphi 0, %s97
      %s114 = sphi 0, %s98
    $region4: #{tpu_custom_call.1} parent=1 // loop_header_branch
      %19 = sbr.rel (%p17) target = $region8
    $region5: #{tpu_custom_call.1} parent=1 // loop_body
      %s21 = ssub.s32 %s16, 1
      %s22 = ssub.s32 %s16, 2
      %s23 = sadd.s32 %s16, 1
      %s24 = ssub.s32 %s16, %s23
      %p25 = scmp.eq.s32.totalorder %s24, 0
      %s27 = sadd.s32 %s26, 1
      %s28 = scalar_select %p25, %s26, %s27
      %p31 = pneg %p25
      %p32 = scmp.eq.s32.totalorder %s16, 1
      %p33 = por %p31, %p32
      %p34 = scmp.ne.s32.totalorder %s26, %s29
      %p35 = scmp.eq.s32.totalorder %s16, 0
      %p36 = por %p34, %p35
      %p37 = scmp.ne.s32.totalorder %s26, %s29
      %p38 = scmp.eq.s32.totalorder %s21, 1
      %p39 = por %p37, %p38
      %p40 = scmp.ne.s32.totalorder %s29, %s30
      %p41 = scmp.eq.s32.totalorder %s21, 0
      %p42 = por %p40, %p41
      %p43 = scmp.ne.s32.totalorder %s29, %s30
      %p44 = scmp.eq.s32.totalorder %s22, 1
      %p45 = por %p43, %p44
      %p47 = scmp.ne.s32.totalorder %s30, %s46
      %p48 = scmp.eq.s32.totalorder %s22, 0
      %p49 = por %p47, %p48
      %s51 = sadd.s32 %s50, 1
      %p54 = scmp.eq.s32.totalorder %s16, 1
      %p55 = scmp.ne.s32.totalorder %s50, %s52
      %p56 = scmp.eq.s32.totalorder %s16, 0
      %p57 = por %p55, %p56
      %p58 = scmp.ne.s32.totalorder %s50, %s52
      %p59 = scmp.eq.s32.totalorder %s21, 1
      %p60 = por %p58, %p59
      %p61 = scmp.ne.s32.totalorder %s52, %s53
      %p62 = scmp.eq.s32.totalorder %s21, 0
      %p63 = por %p61, %p62
      %p64 = scmp.ne.s32.totalorder %s52, %s53
      %p65 = scmp.eq.s32.totalorder %s22, 1
      %p66 = por %p64, %p65
      %p68 = scmp.ne.s32.totalorder %s53, %s67
      %p69 = scmp.eq.s32.totalorder %s22, 0
      %p70 = por %p68, %p69
      %s72 = sadd.s32 %s71, 1
      %p75 = scmp.eq.s32.totalorder %s16, 1
      %p76 = scmp.ne.s32.totalorder %s71, %s73
      %p77 = scmp.eq.s32.totalorder %s16, 0
      %p78 = por %p76, %p77
      %p79 = scmp.ne.s32.totalorder %s71, %s73
      %p80 = scmp.eq.s32.totalorder %s21, 1
      %p81 = por %p79, %p80
      %p82 = scmp.ne.s32.totalorder %s73, %s74
      %p83 = scmp.eq.s32.totalorder %s21, 0
      %p84 = por %p82, %p83
      %p85 = scmp.ne.s32.totalorder %s73, %s74
      %p86 = scmp.eq.s32.totalorder %s22, 1
      %p87 = por %p85, %p86
      %p89 = scmp.ne.s32.totalorder %s74, %s88
      %p90 = scmp.eq.s32.totalorder %s22, 0
      %p91 = por %p89, %p90
      %s92 = ssub.s32 %s16, %s23
      %p93 = scmp.eq.s32.totalorder %s92, 0
      %s95 = sadd.s32 %s94, 1
      %s96 = scalar_select %p93, %s94, %s95
      %p99 = pneg %p93
      %p100 = scmp.eq.s32.totalorder %s16, 1
      %p101 = por %p99, %p100
      %p102 = scmp.ne.s32.totalorder %s94, %s97
      %p103 = scmp.eq.s32.totalorder %s16, 0
      %p104 = por %p102, %p103
      %p105 = scmp.ne.s32.totalorder %s94, %s97
      %p106 = scmp.eq.s32.totalorder %s21, 1
      %p107 = por %p105, %p106
      %p108 = scmp.ne.s32.totalorder %s97, %s98
      %p109 = scmp.eq.s32.totalorder %s21, 0
      %p110 = por %p108, %p109
      %p111 = scmp.ne.s32.totalorder %s97, %s98
      %p112 = scmp.eq.s32.totalorder %s22, 1
      %p113 = por %p111, %p112
      %p115 = scmp.ne.s32.totalorder %s98, %s114
      %p116 = scmp.eq.s32.totalorder %s22, 0
      %p117 = por %p115, %p116
      %p118 = scmp.le.s32.totalorder 1, %s16
      %p119 = scmp.lt.s32.totalorder %s16, 3
      %p120 = pnand %p118, %p119
      %p121 = pneg %p120
      // Predicated region
      $region9: #{tpu_custom_call.1} parent=5 // pred_check
        _
      $region10: #{tpu_custom_call.1} parent=5 // pred_check_branch
        %123 = sbr.rel (%p120) target = $region12
      $region11: #{tpu_custom_call.1} parent=5 // pred_region
        %s124 = ssub.s32 %s16, 1
        // Predicated region
        $region13: #{tpu_custom_call.1} parent=11 // pred_check
          %p125 = pneg %p63
        $region14: #{tpu_custom_call.1} parent=11 // pred_check_branch
          %127 = sbr.rel (%p125) target = $region16
        $region15: #{tpu_custom_call.1} parent=11 // pred_region
          %s129 = ssub.s32 16384, 16384
          %130 = vsyncadd [#allocation6], %s129
          %s131 = sshll.u32 [#allocation5], 4
          %s132 = int_to_ptr.vmem [resolvable:$true] %s131
          %137 = dma.hbm_to_vmem [thread:$0]  %s1, 16384, %s132, [#allocation6], 256, 256, 16
        $region16: #{tpu_custom_call.1} parent=11 // pred_fallthru
          _
        // Predicated region
        $region17: #{tpu_custom_call.1} parent=11 // pred_check
          %p138 = pneg %p84
        $region18: #{tpu_custom_call.1} parent=11 // pred_check_branch
          %140 = sbr.rel (%p138) target = $region20
        $region19: #{tpu_custom_call.1} parent=11 // pred_region
          %s142 = ssub.s32 128, 128
          %143 = vsyncadd [#allocation6], %s142
          %s144 = sshll.u32 [#allocation7], 4
          %s145 = int_to_ptr.vmem [resolvable:$true] %s144
          %150 = dma.hbm_to_vmem [thread:$0]  %s2, 128, %s145, [#allocation6], 32, 32, 2
        $region20: #{tpu_custom_call.1} parent=11 // pred_fallthru
          _
      $region12: #{tpu_custom_call.1} parent=5 // pred_fallthru
        _
      %p151 = scmp.lt.s32.totalorder %s16, 2
      // Predicated region
      $region21: #{tpu_custom_call.1} parent=5 // pred_check
        %p152 = pneg %p151
      $region22: #{tpu_custom_call.1} parent=5 // pred_check_branch
        %154 = sbr.rel (%p152) target = $region24
      $region23: #{tpu_custom_call.1} parent=5 // pred_region
        // Predicated region
        $region25: #{tpu_custom_call.1} parent=23 // pred_check
          %p155 = pneg %p36
        $region26: #{tpu_custom_call.1} parent=23 // pred_check_branch
          %157 = sbr.rel (%p155) target = $region28
        $region27: #{tpu_custom_call.1} parent=23 // pred_region
          %s158 = sand.u32 %s26, 1
          %s159 = scalar_lea.sflag [#allocation3], %s158
          %s160 = sand.u32 %s26, 1
          %s161 = smul.addr %s160, 8
          %s162 = scalar_lea.vmem [#allocation2], %s161
          %s164 = ssub.s32 128, 128
          %165 = vsyncadd %s159, %s164
          %s166 = smul.addr %s16, 128
          %s167 = scalar_lea.hbm %s0, %s166
          %s169 = sshll.u32 %s162, 4
          %s170 = int_to_ptr.vmem [resolvable:$true] %s169
          %172 = dma.hbm_to_vmem [thread:$0]  %s167, 128, %s170, %s159
        $region28: #{tpu_custom_call.1} parent=23 // pred_fallthru
          _
      $region24: #{tpu_custom_call.1} parent=5 // pred_fallthru
        _
      %p173 = scmp.le.s32.totalorder 1, %s16
      %p174 = scmp.lt.s32.totalorder %s16, 3
      %p175 = pnand %p173, %p174
      %p176 = pneg %p175
      // Predicated region
      $region29: #{tpu_custom_call.1} parent=5 // pred_check
        _
      $region30: #{tpu_custom_call.1} parent=5 // pred_check_branch
        %178 = sbr.rel (%p175) target = $region32
      $region31: #{tpu_custom_call.1} parent=5 // pred_region
        %s179 = ssub.s32 %s16, 1
        %s180 = sand.u32 %s29, 1
        %s181 = scalar_lea.sflag [#allocation3], %s180
        %s182 = sand.u32 %s29, 1
        %s183 = smul.addr %s182, 8
        %s184 = scalar_lea.vmem [#allocation2], %s183
        // Predicated region
        $region33: #{tpu_custom_call.1} parent=31 // pred_check
          %p185 = pneg %p42
        $region34: #{tpu_custom_call.1} parent=31 // pred_check_branch
          %187 = sbr.rel (%p185) target = $region36
        $region35: #{tpu_custom_call.1} parent=31 // pred_region
          %188 = dma.done %s181, 128
        $region36: #{tpu_custom_call.1} parent=31 // pred_fallthru
          _
        // Predicated region
        $region37: #{tpu_custom_call.1} parent=31 // pred_check
          %p189 = pneg %p63
        $region38: #{tpu_custom_call.1} parent=31 // pred_check_branch
          %191 = sbr.rel (%p189) target = $region40
        $region39: #{tpu_custom_call.1} parent=31 // pred_region
          %192 = dma.done [#allocation6], 16384
        $region40: #{tpu_custom_call.1} parent=31 // pred_fallthru
          _
        // Predicated region
        $region41: #{tpu_custom_call.1} parent=31 // pred_check
          %p193 = pneg %p84
        $region42: #{tpu_custom_call.1} parent=31 // pred_check_branch
          %195 = sbr.rel (%p193) target = $region44
        $region43: #{tpu_custom_call.1} parent=31 // pred_region
          %196 = dma.done [#allocation6], 128
        $region44: #{tpu_custom_call.1} parent=31 // pred_fallthru
          _
        %s197 = sand.u32 %s29, 1
        %s198 = scalar_lea.sflag [#allocation3], %s197
        %s199 = sand.u32 %s29, 1
        %s200 = smul.addr %s199, 8
        %s201 = scalar_lea.vmem [#allocation2], %s200
        %p202 = pneg %p42
        %p203 = pneg %p39
        %p204 = pneg %p63
        %p205 = pneg %p60
        %p206 = pneg %p84
        %p207 = pneg %p81
        %p208 = pneg %p110
        %p209 = pneg %p107
        %s210 = sand.u32 %s97, 1
        %s211 = scalar_lea.sflag [#allocation4], %s210
        %s212 = sand.u32 %s97, 1
        %s213 = smul.addr %s212, 8
        %s214 = scalar_lea.vmem [#allocation8], %s213
        %v215 = vld [vmem:[%s184] sm:$0xff]
        %v216 = vld [vmem:[#allocation5] sm:$0xff]
        %v217 = vld [vmem:[#allocation5 + $0x8] sm:$0xff]
        %v218 = vld [vmem:[#allocation5 + $0x10] sm:$0xff]
        %v219 = vld [vmem:[#allocation5 + $0x18] sm:$0xff]
        %v220 = vld [vmem:[#allocation5 + $0x20] sm:$0xff]
        %v221 = vld [vmem:[#allocation5 + $0x28] sm:$0xff]
        %v222 = vld [vmem:[#allocation5 + $0x30] sm:$0xff]
        %v223 = vld [vmem:[#allocation5 + $0x38] sm:$0xff]
        %v224 = vld [vmem:[#allocation5 + $0x40] sm:$0xff]
        %v225 = vld [vmem:[#allocation5 + $0x48] sm:$0xff]
        %v226 = vld [vmem:[#allocation5 + $0x50] sm:$0xff]
        %v227 = vld [vmem:[#allocation5 + $0x58] sm:$0xff]
        %v228 = vld [vmem:[#allocation5 + $0x60] sm:$0xff]
        %v229 = vld [vmem:[#allocation5 + $0x68] sm:$0xff]
        %v230 = vld [vmem:[#allocation5 + $0x70] sm:$0xff]
        %v231 = vld [vmem:[#allocation5 + $0x78] sm:$0xff]
        %v232 = vld [vmem:[#allocation5 + $0x80] sm:$0xff]
        %v233 = vld [vmem:[#allocation5 + $0x88] sm:$0xff]
        %v234 = vld [vmem:[#allocation5 + $0x90] sm:$0xff]
        %v235 = vld [vmem:[#allocation5 + $0x98] sm:$0xff]
        %v236 = vld [vmem:[#allocation5 + $0xa0] sm:$0xff]
        %v237 = vld [vmem:[#allocation5 + $0xa8] sm:$0xff]
        %v238 = vld [vmem:[#allocation5 + $0xb0] sm:$0xff]
        %v239 = vld [vmem:[#allocation5 + $0xb8] sm:$0xff]
        %v240 = vld [vmem:[#allocation5 + $0xc0] sm:$0xff]
        %v241 = vld [vmem:[#allocation5 + $0xc8] sm:$0xff]
        %v242 = vld [vmem:[#allocation5 + $0xd0] sm:$0xff]
        %v243 = vld [vmem:[#allocation5 + $0xd8] sm:$0xff]
        %v244 = vld [vmem:[#allocation5 + $0xe0] sm:$0xff]
        %v245 = vld [vmem:[#allocation5 + $0xe8] sm:$0xff]
        %v246 = vld [vmem:[#allocation5 + $0xf0] sm:$0xff]
        %v247 = vld [vmem:[#allocation5 + $0xf8] sm:$0xff]
        %v248 = vld [vmem:[#allocation7] sm:$0x3]
        %v250 = vlaneseq
        %v251 = vshrl.u32 %v250, 7
        %v252 = vsub.s32 0, %v251
        %v253 = vrot.slane %v248, %v252
        %v254 = vlaneseq
        %v255 = vshrl.u32 %v254, 7
        %v256 = vsub.s32 1, %v255
        %v257 = vrot.slane %v248, %v256
        %260 = vmatprep.subr.mxu0 %v217
        %261 = vmatpush1.msra.mxu0 %v216
        %262 = vmatprep.subr.mxu0 %v219
        %263 = vmatpush1.msra.mxu0 %v218
        %264 = vmatprep.subr.mxu0 %v221
        %265 = vmatpush1.msra.mxu0 %v220
        %266 = vmatprep.subr.mxu0 %v223
        %267 = vmatpush1.msra.mxu0 %v222
        %268 = vmatprep.subr.mxu0 %v225
        %269 = vmatpush1.msra.mxu0 %v224
        %270 = vmatprep.subr.mxu0 %v227
        %271 = vmatpush1.msra.mxu0 %v226
        %272 = vmatprep.subr.mxu0 %v229
        %273 = vmatpush1.msra.mxu0 %v228
        %274 = vmatprep.subr.mxu0 %v231
        %275 = vmatpush1.msra.mxu0 %v230
        %276 = vmatprep.subr.mxu0 %v233
        %277 = vmatpush1.msra.mxu0 %v232
        %278 = vmatprep.subr.mxu0 %v235
        %279 = vmatpush1.msra.mxu0 %v234
        %280 = vmatprep.subr.mxu0 %v237
        %281 = vmatpush1.msra.mxu0 %v236
        %282 = vmatprep.subr.mxu0 %v239
        %283 = vmatpush1.msra.mxu0 %v238
        %284 = vmatprep.subr.mxu0 %v241
        %285 = vmatpush1.msra.mxu0 %v240
        %286 = vmatprep.subr.mxu0 %v243
        %287 = vmatpush1.msra.mxu0 %v242
        %288 = vmatprep.subr.mxu0 %v245
        %289 = vmatpush1.msra.mxu0 %v244
        %290 = vmatprep.subr.mxu0 %v247
        %291 = vmatpush1.msra.mxu0 %v246
        %292 = vmatprep.subr.mxu0 0.0
        %293 = vmatpush1.msra.mxu0 0.0
        %294 = vmatprep.subr.mxu0 0.0
        %295 = vmatpush1.msra.mxu0 0.0
        %296 = vmatprep.subr.mxu0 0.0
        %297 = vmatpush1.msra.mxu0 0.0
        %298 = vmatprep.subr.mxu0 0.0
        %299 = vmatpush1.msra.mxu0 0.0
        %300 = vmatprep.subr.mxu0 0.0
        %301 = vmatpush1.msra.mxu0 0.0
        %302 = vmatprep.subr.mxu0 0.0
        %303 = vmatpush1.msra.mxu0 0.0
        %304 = vmatprep.subr.mxu0 0.0
        %305 = vmatpush1.msra.mxu0 0.0
        %306 = vmatprep.subr.mxu0 0.0
        %307 = vmatpush1.msra.mxu0 0.0
        %308 = vmatprep.subr.mxu0 0.0
        %309 = vmatpush1.msra.mxu0 0.0
        %310 = vmatprep.subr.mxu0 0.0
        %311 = vmatpush1.msra.mxu0 0.0
        %312 = vmatprep.subr.mxu0 0.0
        %313 = vmatpush1.msra.mxu0 0.0
        %314 = vmatprep.subr.mxu0 0.0
        %315 = vmatpush1.msra.mxu0 0.0
        %316 = vmatprep.subr.mxu0 0.0
        %317 = vmatpush1.msra.mxu0 0.0
        %318 = vmatprep.subr.mxu0 0.0
        %319 = vmatpush1.msra.mxu0 0.0
        %320 = vmatprep.subr.mxu0 0.0
        %321 = vmatpush1.msra.mxu0 0.0
        %322 = vmatprep.subr.mxu0 0.0
        %323 = vmatpush1.msra.mxu0 0.0
        %324 = vmatprep.mubr.f32.mxu0 0.0
        %325 = vmatmul.mubr.f32.gmra.mrb[0].mxu0 %v215
        %v326 = vpop.f32.mrb[0].mxu0
        %v327 = vadd.f32 %v253, %v326
        %v328 = vpop.f32.mrb[0].mxu0
        %v329 = vadd.f32 %v257, %v328
        %330 = vdwg.mxu0
        %v331 = vmax.f32 %v327, 0.0
        %v332 = vxor.u32 %v329, 2147483648
        %v333 = vmul.f32 %v332, 1.442695
        %v334 = vpow.pop %v333
        %v335 = vadd.f32 %v334, 1.0
        %v336 = vrcp.pop %v335
        %v337 = vmul.f32 1.0, %v336
        %v338 = vsub.f32 %v331, %v215
        %v339 = vmul.f32 %v337, %v338
        %v340 = vadd.f32 %v215, %v339
        %s341 = scalar_lea.vmem [#allocation5], 256
        %v342 = vld [vmem:[%s341] sm:$0xff]
        %v343 = vld [vmem:[%s341 + $0x8] sm:$0xff]
        %v344 = vld [vmem:[%s341 + $0x10] sm:$0xff]
        %v345 = vld [vmem:[%s341 + $0x18] sm:$0xff]
        %v346 = vld [vmem:[%s341 + $0x20] sm:$0xff]
        %v347 = vld [vmem:[%s341 + $0x28] sm:$0xff]
        %v348 = vld [vmem:[%s341 + $0x30] sm:$0xff]
        %v349 = vld [vmem:[%s341 + $0x38] sm:$0xff]
        %v350 = vld [vmem:[%s341 + $0x40] sm:$0xff]
        %v351 = vld [vmem:[%s341 + $0x48] sm:$0xff]
        %v352 = vld [vmem:[%s341 + $0x50] sm:$0xff]
        %v353 = vld [vmem:[%s341 + $0x58] sm:$0xff]
        %v354 = vld [vmem:[%s341 + $0x60] sm:$0xff]
        %v355 = vld [vmem:[%s341 + $0x68] sm:$0xff]
        %v356 = vld [vmem:[%s341 + $0x70] sm:$0xff]
        %v357 = vld [vmem:[%s341 + $0x78] sm:$0xff]
        %v358 = vld [vmem:[%s341 + $0x80] sm:$0xff]
        %v359 = vld [vmem:[%s341 + $0x88] sm:$0xff]
        %v360 = vld [vmem:[%s341 + $0x90] sm:$0xff]
        %v361 = vld [vmem:[%s341 + $0x98] sm:$0xff]
        %v362 = vld [vmem:[%s341 + $0xa0] sm:$0xff]
        %v363 = vld [vmem:[%s341 + $0xa8] sm:$0xff]
        %v364 = vld [vmem:[%s341 + $0xb0] sm:$0xff]
        %v365 = vld [vmem:[%s341 + $0xb8] sm:$0xff]
        %v366 = vld [vmem:[%s341 + $0xc0] sm:$0xff]
        %v367 = vld [vmem:[%s341 + $0xc8] sm:$0xff]
        %v368 = vld [vmem:[%s341 + $0xd0] sm:$0xff]
        %v369 = vld [vmem:[%s341 + $0xd8] sm:$0xff]
        %v370 = vld [vmem:[%s341 + $0xe0] sm:$0xff]
        %v371 = vld [vmem:[%s341 + $0xe8] sm:$0xff]
        %v372 = vld [vmem:[%s341 + $0xf0] sm:$0xff]
        %v373 = vld [vmem:[%s341 + $0xf8] sm:$0xff]
        %s374 = scalar_lea.vmem [#allocation7], 2
        %v375 = vld [vmem:[%s374] sm:$0x3]
        %v377 = vlaneseq
        %v378 = vshrl.u32 %v377, 7
        %v379 = vsub.s32 0, %v378
        %v380 = vrot.slane %v375, %v379
        %v381 = vlaneseq
        %v382 = vshrl.u32 %v381, 7
        %v383 = vsub.s32 1, %v382
        %v384 = vrot.slane %v375, %v383
        %387 = vmatprep.subr.mxu0 %v343
        %388 = vmatpush1.msra.mxu0 %v342
        %389 = vmatprep.subr.mxu0 %v345
        %390 = vmatpush1.msra.mxu0 %v344
        %391 = vmatprep.subr.mxu0 %v347
        %392 = vmatpush1.msra.mxu0 %v346
        %393 = vmatprep.subr.mxu0 %v349
        %394 = vmatpush1.msra.mxu0 %v348
        %395 = vmatprep.subr.mxu0 %v351
        %396 = vmatpush1.msra.mxu0 %v350
        %397 = vmatprep.subr.mxu0 %v353
        %398 = vmatpush1.msra.mxu0 %v352
        %399 = vmatprep.subr.mxu0 %v355
        %400 = vmatpush1.msra.mxu0 %v354
        %401 = vmatprep.subr.mxu0 %v357
        %402 = vmatpush1.msra.mxu0 %v356
        %403 = vmatprep.subr.mxu0 %v359
        %404 = vmatpush1.msra.mxu0 %v358
        %405 = vmatprep.subr.mxu0 %v361
        %406 = vmatpush1.msra.mxu0 %v360
        %407 = vmatprep.subr.mxu0 %v363
        %408 = vmatpush1.msra.mxu0 %v362
        %409 = vmatprep.subr.mxu0 %v365
        %410 = vmatpush1.msra.mxu0 %v364
        %411 = vmatprep.subr.mxu0 %v367
        %412 = vmatpush1.msra.mxu0 %v366
        %413 = vmatprep.subr.mxu0 %v369
        %414 = vmatpush1.msra.mxu0 %v368
        %415 = vmatprep.subr.mxu0 %v371
        %416 = vmatpush1.msra.mxu0 %v370
        %417 = vmatprep.subr.mxu0 %v373
        %418 = vmatpush1.msra.mxu0 %v372
        %419 = vmatprep.subr.mxu0 0.0
        %420 = vmatpush1.msra.mxu0 0.0
        %421 = vmatprep.subr.mxu0 0.0
        %422 = vmatpush1.msra.mxu0 0.0
        %423 = vmatprep.subr.mxu0 0.0
        %424 = vmatpush1.msra.mxu0 0.0
        %425 = vmatprep.subr.mxu0 0.0
        %426 = vmatpush1.msra.mxu0 0.0
        %427 = vmatprep.subr.mxu0 0.0
        %428 = vmatpush1.msra.mxu0 0.0
        %429 = vmatprep.subr.mxu0 0.0
        %430 = vmatpush1.msra.mxu0 0.0
        %431 = vmatprep.subr.mxu0 0.0
        %432 = vmatpush1.msra.mxu0 0.0
        %433 = vmatprep.subr.mxu0 0.0
        %434 = vmatpush1.msra.mxu0 0.0
        %435 = vmatprep.subr.mxu0 0.0
        %436 = vmatpush1.msra.mxu0 0.0
        %437 = vmatprep.subr.mxu0 0.0
        %438 = vmatpush1.msra.mxu0 0.0
        %439 = vmatprep.subr.mxu0 0.0
        %440 = vmatpush1.msra.mxu0 0.0
        %441 = vmatprep.subr.mxu0 0.0
        %442 = vmatpush1.msra.mxu0 0.0
        %443 = vmatprep.subr.mxu0 0.0
        %444 = vmatpush1.msra.mxu0 0.0
        %445 = vmatprep.subr.mxu0 0.0
        %446 = vmatpush1.msra.mxu0 0.0
        %447 = vmatprep.subr.mxu0 0.0
        %448 = vmatpush1.msra.mxu0 0.0
        %449 = vmatprep.subr.mxu0 0.0
        %450 = vmatpush1.msra.mxu0 0.0
        %451 = vmatprep.mubr.f32.mxu0 0.0
        %452 = vmatmul.mubr.f32.gmra.mrb[0].mxu0 %v340
        %v453 = vpop.f32.mrb[0].mxu0
        %v454 = vadd.f32 %v380, %v453
        %v455 = vpop.f32.mrb[0].mxu0
        %v456 = vadd.f32 %v384, %v455
        %457 = vdwg.mxu0
        %v458 = vmax.f32 %v454, 0.0
        %v459 = vxor.u32 %v456, 2147483648
        %v460 = vmul.f32 %v459, 1.442695
        %v461 = vpow.pop %v460
        %v462 = vadd.f32 %v461, 1.0
        %v463 = vrcp.pop %v462
        %v464 = vmul.f32 1.0, %v463
        %v465 = vsub.f32 %v458, %v340
        %v466 = vmul.f32 %v464, %v465
        %v467 = vadd.f32 %v340, %v466
        %s468 = scalar_lea.vmem [#allocation5], 512
        %v469 = vld [vmem:[%s468] sm:$0xff]
        %v470 = vld [vmem:[%s468 + $0x8] sm:$0xff]
        %v471 = vld [vmem:[%s468 + $0x10] sm:$0xff]
        %v472 = vld [vmem:[%s468 + $0x18] sm:$0xff]
        %v473 = vld [vmem:[%s468 + $0x20] sm:$0xff]
        %v474 = vld [vmem:[%s468 + $0x28] sm:$0xff]
        %v475 = vld [vmem:[%s468 + $0x30] sm:$0xff]
        %v476 = vld [vmem:[%s468 + $0x38] sm:$0xff]
        %v477 = vld [vmem:[%s468 + $0x40] sm:$0xff]
        %v478 = vld [vmem:[%s468 + $0x48] sm:$0xff]
        %v479 = vld [vmem:[%s468 + $0x50] sm:$0xff]
        %v480 = vld [vmem:[%s468 + $0x58] sm:$0xff]
        %v481 = vld [vmem:[%s468 + $0x60] sm:$0xff]
        %v482 = vld [vmem:[%s468 + $0x68] sm:$0xff]
        %v483 = vld [vmem:[%s468 + $0x70] sm:$0xff]
        %v484 = vld [vmem:[%s468 + $0x78] sm:$0xff]
        %v485 = vld [vmem:[%s468 + $0x80] sm:$0xff]
        %v486 = vld [vmem:[%s468 + $0x88] sm:$0xff]
        %v487 = vld [vmem:[%s468 + $0x90] sm:$0xff]
        %v488 = vld [vmem:[%s468 + $0x98] sm:$0xff]
        %v489 = vld [vmem:[%s468 + $0xa0] sm:$0xff]
        %v490 = vld [vmem:[%s468 + $0xa8] sm:$0xff]
        %v491 = vld [vmem:[%s468 + $0xb0] sm:$0xff]
        %v492 = vld [vmem:[%s468 + $0xb8] sm:$0xff]
        %v493 = vld [vmem:[%s468 + $0xc0] sm:$0xff]
        %v494 = vld [vmem:[%s468 + $0xc8] sm:$0xff]
        %v495 = vld [vmem:[%s468 + $0xd0] sm:$0xff]
        %v496 = vld [vmem:[%s468 + $0xd8] sm:$0xff]
        %v497 = vld [vmem:[%s468 + $0xe0] sm:$0xff]
        %v498 = vld [vmem:[%s468 + $0xe8] sm:$0xff]
        %v499 = vld [vmem:[%s468 + $0xf0] sm:$0xff]
        %v500 = vld [vmem:[%s468 + $0xf8] sm:$0xff]
        %s501 = scalar_lea.vmem [#allocation7], 4
        %v502 = vld [vmem:[%s501] sm:$0x3]
        %v504 = vlaneseq
        %v505 = vshrl.u32 %v504, 7
        %v506 = vsub.s32 0, %v505
        %v507 = vrot.slane %v502, %v506
        %v508 = vlaneseq
        %v509 = vshrl.u32 %v508, 7
        %v510 = vsub.s32 1, %v509
        %v511 = vrot.slane %v502, %v510
        %514 = vmatprep.subr.mxu0 %v470
        %515 = vmatpush1.msra.mxu0 %v469
        %516 = vmatprep.subr.mxu0 %v472
        %517 = vmatpush1.msra.mxu0 %v471
        %518 = vmatprep.subr.mxu0 %v474
        %519 = vmatpush1.msra.mxu0 %v473
        %520 = vmatprep.subr.mxu0 %v476
        %521 = vmatpush1.msra.mxu0 %v475
        %522 = vmatprep.subr.mxu0 %v478
        %523 = vmatpush1.msra.mxu0 %v477
        %524 = vmatprep.subr.mxu0 %v480
        %525 = vmatpush1.msra.mxu0 %v479
        %526 = vmatprep.subr.mxu0 %v482
        %527 = vmatpush1.msra.mxu0 %v481
        %528 = vmatprep.subr.mxu0 %v484
        %529 = vmatpush1.msra.mxu0 %v483
        %530 = vmatprep.subr.mxu0 %v486
        %531 = vmatpush1.msra.mxu0 %v485
        %532 = vmatprep.subr.mxu0 %v488
        %533 = vmatpush1.msra.mxu0 %v487
        %534 = vmatprep.subr.mxu0 %v490
        %535 = vmatpush1.msra.mxu0 %v489
        %536 = vmatprep.subr.mxu0 %v492
        %537 = vmatpush1.msra.mxu0 %v491
        %538 = vmatprep.subr.mxu0 %v494
        %539 = vmatpush1.msra.mxu0 %v493
        %540 = vmatprep.subr.mxu0 %v496
        %541 = vmatpush1.msra.mxu0 %v495
        %542 = vmatprep.subr.mxu0 %v498
        %543 = vmatpush1.msra.mxu0 %v497
        %544 = vmatprep.subr.mxu0 %v500
        %545 = vmatpush1.msra.mxu0 %v499
        %546 = vmatprep.subr.mxu0 0.0
        %547 = vmatpush1.msra.mxu0 0.0
        %548 = vmatprep.subr.mxu0 0.0
        %549 = vmatpush1.msra.mxu0 0.0
        %550 = vmatprep.subr.mxu0 0.0
        %551 = vmatpush1.msra.mxu0 0.0
        %552 = vmatprep.subr.mxu0 0.0
        %553 = vmatpush1.msra.mxu0 0.0
        %554 = vmatprep.subr.mxu0 0.0
        %555 = vmatpush1.msra.mxu0 0.0
        %556 = vmatprep.subr.mxu0 0.0
        %557 = vmatpush1.msra.mxu0 0.0
        %558 = vmatprep.subr.mxu0 0.0
        %559 = vmatpush1.msra.mxu0 0.0
        %560 = vmatprep.subr.mxu0 0.0
        %561 = vmatpush1.msra.mxu0 0.0
        %562 = vmatprep.subr.mxu0 0.0
        %563 = vmatpush1.msra.mxu0 0.0
        %564 = vmatprep.subr.mxu0 0.0
        %565 = vmatpush1.msra.mxu0 0.0
        %566 = vmatprep.subr.mxu0 0.0
        %567 = vmatpush1.msra.mxu0 0.0
        %568 = vmatprep.subr.mxu0 0.0
        %569 = vmatpush1.msra.mxu0 0.0
        %570 = vmatprep.subr.mxu0 0.0
        %571 = vmatpush1.msra.mxu0 0.0
        %572 = vmatprep.subr.mxu0 0.0
        %573 = vmatpush1.msra.mxu0 0.0
        %574 = vmatprep.subr.mxu0 0.0
        %575 = vmatpush1.msra.mxu0 0.0
        %576 = vmatprep.subr.mxu0 0.0
        %577 = vmatpush1.msra.mxu0 0.0
        %578 = vmatprep.mubr.f32.mxu0 0.0
        %579 = vmatmul.mubr.f32.gmra.mrb[0].mxu0 %v467
        %v580 = vpop.f32.mrb[0].mxu0
        %v581 = vadd.f32 %v507, %v580
        %v582 = vpop.f32.mrb[0].mxu0
        %v583 = vadd.f32 %v511, %v582
        %584 = vdwg.mxu0
        %v585 = vmax.f32 %v581, 0.0
        %v586 = vxor.u32 %v583, 2147483648
        %v587 = vmul.f32 %v586, 1.442695
        %v588 = vpow.pop %v587
        %v589 = vadd.f32 %v588, 1.0
        %v590 = vrcp.pop %v589
        %v591 = vmul.f32 1.0, %v590
        %v592 = vsub.f32 %v585, %v467
        %v593 = vmul.f32 %v591, %v592
        %v594 = vadd.f32 %v467, %v593
        %s595 = scalar_lea.vmem [#allocation5], 768
        %v596 = vld [vmem:[%s595] sm:$0xff]
        %v597 = vld [vmem:[%s595 + $0x8] sm:$0xff]
        %v598 = vld [vmem:[%s595 + $0x10] sm:$0xff]
        %v599 = vld [vmem:[%s595 + $0x18] sm:$0xff]
        %v600 = vld [vmem:[%s595 + $0x20] sm:$0xff]
        %v601 = vld [vmem:[%s595 + $0x28] sm:$0xff]
        %v602 = vld [vmem:[%s595 + $0x30] sm:$0xff]
        %v603 = vld [vmem:[%s595 + $0x38] sm:$0xff]
        %v604 = vld [vmem:[%s595 + $0x40] sm:$0xff]
        %v605 = vld [vmem:[%s595 + $0x48] sm:$0xff]
        %v606 = vld [vmem:[%s595 + $0x50] sm:$0xff]
        %v607 = vld [vmem:[%s595 + $0x58] sm:$0xff]
        %v608 = vld [vmem:[%s595 + $0x60] sm:$0xff]
        %v609 = vld [vmem:[%s595 + $0x68] sm:$0xff]
        %v610 = vld [vmem:[%s595 + $0x70] sm:$0xff]
        %v611 = vld [vmem:[%s595 + $0x78] sm:$0xff]
        %v612 = vld [vmem:[%s595 + $0x80] sm:$0xff]
        %v613 = vld [vmem:[%s595 + $0x88] sm:$0xff]
        %v614 = vld [vmem:[%s595 + $0x90] sm:$0xff]
        %v615 = vld [vmem:[%s595 + $0x98] sm:$0xff]
        %v616 = vld [vmem:[%s595 + $0xa0] sm:$0xff]
        %v617 = vld [vmem:[%s595 + $0xa8] sm:$0xff]
        %v618 = vld [vmem:[%s595 + $0xb0] sm:$0xff]
        %v619 = vld [vmem:[%s595 + $0xb8] sm:$0xff]
        %v620 = vld [vmem:[%s595 + $0xc0] sm:$0xff]
        %v621 = vld [vmem:[%s595 + $0xc8] sm:$0xff]
        %v622 = vld [vmem:[%s595 + $0xd0] sm:$0xff]
        %v623 = vld [vmem:[%s595 + $0xd8] sm:$0xff]
        %v624 = vld [vmem:[%s595 + $0xe0] sm:$0xff]
        %v625 = vld [vmem:[%s595 + $0xe8] sm:$0xff]
        %v626 = vld [vmem:[%s595 + $0xf0] sm:$0xff]
        %v627 = vld [vmem:[%s595 + $0xf8] sm:$0xff]
        %s628 = scalar_lea.vmem [#allocation7], 6
        %v629 = vld [vmem:[%s628] sm:$0x3]
        %v631 = vlaneseq
        %v632 = vshrl.u32 %v631, 7
        %v633 = vsub.s32 0, %v632
        %v634 = vrot.slane %v629, %v633
        %v635 = vlaneseq
        %v636 = vshrl.u32 %v635, 7
        %v637 = vsub.s32 1, %v636
        %v638 = vrot.slane %v629, %v637
        %641 = vmatprep.subr.mxu0 %v597
        %642 = vmatpush1.msra.mxu0 %v596
        %643 = vmatprep.subr.mxu0 %v599
        %644 = vmatpush1.msra.mxu0 %v598
        %645 = vmatprep.subr.mxu0 %v601
        %646 = vmatpush1.msra.mxu0 %v600
        %647 = vmatprep.subr.mxu0 %v603
        %648 = vmatpush1.msra.mxu0 %v602
        %649 = vmatprep.subr.mxu0 %v605
        %650 = vmatpush1.msra.mxu0 %v604
        %651 = vmatprep.subr.mxu0 %v607
        %652 = vmatpush1.msra.mxu0 %v606
        %653 = vmatprep.subr.mxu0 %v609
        %654 = vmatpush1.msra.mxu0 %v608
        %655 = vmatprep.subr.mxu0 %v611
        %656 = vmatpush1.msra.mxu0 %v610
        %657 = vmatprep.subr.mxu0 %v613
        %658 = vmatpush1.msra.mxu0 %v612
        %659 = vmatprep.subr.mxu0 %v615
        %660 = vmatpush1.msra.mxu0 %v614
        %661 = vmatprep.subr.mxu0 %v617
        %662 = vmatpush1.msra.mxu0 %v616
        %663 = vmatprep.subr.mxu0 %v619
        %664 = vmatpush1.msra.mxu0 %v618
        %665 = vmatprep.subr.mxu0 %v621
        %666 = vmatpush1.msra.mxu0 %v620
        %667 = vmatprep.subr.mxu0 %v623
        %668 = vmatpush1.msra.mxu0 %v622
        %669 = vmatprep.subr.mxu0 %v625
        %670 = vmatpush1.msra.mxu0 %v624
        %671 = vmatprep.subr.mxu0 %v627
        %672 = vmatpush1.msra.mxu0 %v626
        %673 = vmatprep.subr.mxu0 0.0
        %674 = vmatpush1.msra.mxu0 0.0
        %675 = vmatprep.subr.mxu0 0.0
        %676 = vmatpush1.msra.mxu0 0.0
        %677 = vmatprep.subr.mxu0 0.0
        %678 = vmatpush1.msra.mxu0 0.0
        %679 = vmatprep.subr.mxu0 0.0
        %680 = vmatpush1.msra.mxu0 0.0
        %681 = vmatprep.subr.mxu0 0.0
        %682 = vmatpush1.msra.mxu0 0.0
        %683 = vmatprep.subr.mxu0 0.0
        %684 = vmatpush1.msra.mxu0 0.0
        %685 = vmatprep.subr.mxu0 0.0
        %686 = vmatpush1.msra.mxu0 0.0
        %687 = vmatprep.subr.mxu0 0.0
        %688 = vmatpush1.msra.mxu0 0.0
        %689 = vmatprep.subr.mxu0 0.0
        %690 = vmatpush1.msra.mxu0 0.0
        %691 = vmatprep.subr.mxu0 0.0
        %692 = vmatpush1.msra.mxu0 0.0
        %693 = vmatprep.subr.mxu0 0.0
        %694 = vmatpush1.msra.mxu0 0.0
        %695 = vmatprep.subr.mxu0 0.0
        %696 = vmatpush1.msra.mxu0 0.0
        %697 = vmatprep.subr.mxu0 0.0
        %698 = vmatpush1.msra.mxu0 0.0
        %699 = vmatprep.subr.mxu0 0.0
        %700 = vmatpush1.msra.mxu0 0.0
        %701 = vmatprep.subr.mxu0 0.0
        %702 = vmatpush1.msra.mxu0 0.0
        %703 = vmatprep.subr.mxu0 0.0
        %704 = vmatpush1.msra.mxu0 0.0
        %705 = vmatprep.mubr.f32.mxu0 0.0
        %706 = vmatmul.mubr.f32.gmra.mrb[0].mxu0 %v594
        %v707 = vpop.f32.mrb[0].mxu0
        %v708 = vadd.f32 %v634, %v707
        %v709 = vpop.f32.mrb[0].mxu0
        %v710 = vadd.f32 %v638, %v709
        %711 = vdwg.mxu0
        %v712 = vmax.f32 %v708, 0.0
        %v713 = vxor.u32 %v710, 2147483648
        %v714 = vmul.f32 %v713, 1.442695
        %v715 = vpow.pop %v714
        %v716 = vadd.f32 %v715, 1.0
        %v717 = vrcp.pop %v716
        %v718 = vmul.f32 1.0, %v717
        %v719 = vsub.f32 %v712, %v594
        %v720 = vmul.f32 %v718, %v719
        %v721 = vadd.f32 %v594, %v720
        %722 = vst [vmem:[%s214] sm:$0xff] %v721
        %s723 = sand.u32 %s97, 1
        %s724 = scalar_lea.sflag [#allocation4], %s723
        %s725 = sand.u32 %s97, 1
        %s726 = smul.addr %s725, 8
        %s727 = scalar_lea.vmem [#allocation8], %s726
        // Predicated region
        $region45: #{tpu_custom_call.1} parent=31 // pred_check
          %p728 = pneg %p107
        $region46: #{tpu_custom_call.1} parent=31 // pred_check_branch
          %730 = sbr.rel (%p728) target = $region48
        $region47: #{tpu_custom_call.1} parent=31 // pred_region
          %s732 = ssub.s32 128, 128
          %733 = vsyncadd %s724, %s732
          %s734 = smul.addr %s21, 128
          %s735 = scalar_lea.hbm %s3, %s734
          %s737 = sshll.u32 %s727, 4
          %s738 = int_to_ptr.vmem [resolvable:$true] %s737
          %740 = dma.vmem_to_hbm [thread:$0]  %s738, 128, %s735, %s724
        $region48: #{tpu_custom_call.1} parent=31 // pred_fallthru
          _
      $region32: #{tpu_custom_call.1} parent=5 // pred_fallthru
        _
      %p741 = scmp.le.s32.totalorder 2, %s16
      // Predicated region
      $region49: #{tpu_custom_call.1} parent=5 // pred_check
        %p742 = pneg %p741
      $region50: #{tpu_custom_call.1} parent=5 // pred_check_branch
        %744 = sbr.rel (%p742) target = $region52
      $region51: #{tpu_custom_call.1} parent=5 // pred_region
        %s745 = ssub.s32 %s16, 2
        // Predicated region
        $region53: #{tpu_custom_call.1} parent=51 // pred_check
          %p746 = pneg %p113
        $region54: #{tpu_custom_call.1} parent=51 // pred_check_branch
          %748 = sbr.rel (%p746) target = $region56
        $region55: #{tpu_custom_call.1} parent=51 // pred_region
          %s749 = sand.u32 %s98, 1
          %s750 = scalar_lea.sflag [#allocation4], %s749
          %s751 = sand.u32 %s98, 1
          %s752 = smul.addr %s751, 8
          %s753 = scalar_lea.vmem [#allocation8], %s752
          %754 = dma.done %s750, 128
        $region56: #{tpu_custom_call.1} parent=51 // pred_fallthru
          _
      $region52: #{tpu_custom_call.1} parent=5 // pred_fallthru
        _
    $region6: #{tpu_custom_call.1} parent=1 // loop_footer
      %s20 = sadd.s32 1, %s16
    $region7: #{tpu_custom_call.1} parent=1 // loop_footer_branch
      %15 = sbr.rel target = $region3
    $region8: #{tpu_custom_call.1} parent=1 // loop_exit
      _
    %755 = vsyncpa [#allocation3], 1
    %s756 = scalar_lea.sflag [#allocation3], 1
    %757 = vsyncpa %s756, 1
    %758 = vsyncpa [#allocation6], 1
    %759 = vsyncpa [#allocation4], 1
    %s760 = scalar_lea.sflag [#allocation4], 1
    %761 = vsyncpa %s760, 1

</llo_original>
